<compile_context>
chip_gen: v5e
topology: v5e:2x2
jax: 0.10.0
libtpu: 0.0.40
codegen_flags: <defaults>
</compile_context>

<pallas_src>
import jax
import jax.numpy as jnp
from jax.experimental import pallas as pl
from jax.experimental.pallas import tpu as pltpu

LANE = 128


def _round_up(n, m):
    return ((n + m - 1) // m) * m


def _pad2(a, rows, cols):
    pr, pc = rows - a.shape[0], cols - a.shape[1]
    if pr == 0 and pc == 0:
        return a
    return jnp.pad(a, ((0, pr), (0, pc)))


def _pad_feature(d):
    """Lane-pad a feature dim.  Prefer a 256-multiple (matches the v6e/v7x
    2x256x256 MXU) when the extra zero padding over the 128-aligned size is
    <= 1/8 of it; otherwise keep the 128-aligned size (v5e MXU is 4x128x128)."""
    p128 = _round_up(d, LANE)
    p256 = _round_up(d, 2 * LANE)
    return p256 if (p256 - p128) * 8 <= p128 else p128


def _vmem_limit_bytes():
    """Generation-aware scoped-VMEM limit, leaving ~25% headroom."""
    try:
        cap = int(pltpu.get_tpu_info().vmem_capacity_bytes)
    except Exception:
        cap = 128 * 1024 * 1024
    return max(32 * 1024 * 1024, (cap * 3) // 4)


def mlp_kernel(x_ref, w1_ref, b1_ref, w2_ref, b2_ref,
               w3_ref, b3_ref, w4_ref, b4_ref, o_ref):
    # One batch tile per grid step; weights/biases are VMEM-resident across the
    # whole grid.  4 MXU matmuls with f32 accumulation; bias-add / ReLU on the
    # VPU in f32; activations are cast to the weight dtype (bf16 by default)
    # before feeding the next MXU pass.
    h = jnp.dot(x_ref[...], w1_ref[...],
                preferred_element_type=jnp.float32) + b1_ref[...]
    h = jnp.maximum(h, 0.0)

    h = jnp.dot(h.astype(w2_ref.dtype), w2_ref[...],
                preferred_element_type=jnp.float32) + b2_ref[...]
    h = jnp.maximum(h, 0.0)

    h = jnp.dot(h.astype(w3_ref.dtype), w3_ref[...],
                preferred_element_type=jnp.float32) + b3_ref[...]
    h = jnp.maximum(h, 0.0)

    h = jnp.dot(h.astype(w4_ref.dtype), w4_ref[...],
                preferred_element_type=jnp.float32) + b4_ref[...]

    o_ref[...] = h.astype(o_ref.dtype)


def mlp_forward(x, params, *, block_b=512, use_bf16=True):
    """x: (B, input_dim) f32.  params: w1..w4 stored (in, out), b1..b4 (1, out)."""
    B, d_in = x.shape
    d_h = params["w1"].shape[1]
    d_out = params["w4"].shape[1]

    w_dtype = jnp.bfloat16 if use_bf16 else jnp.float32
    sub = 16 if use_bf16 else 8          # sublane packing of the matmul-input dtype

    # Lane-pad only the hidden/output feature dims; d_in stays unpadded (a
    # block equal to the full array dim is legal), so x is not copied in HBM
    # for padding.  Zero padding preserves the math: padded hidden lanes are
    # ReLU(0)=0, padded output lanes are sliced off below.
    d_h_p = _pad_feature(d_h)
    d_out_p = _pad_feature(d_out)

    # Batch tile: multiple of `sub`, capped by block_b, and — when B allows —
    # small enough that the grid has >= 2 steps so the "parallel" axis shards
    # across both TensorCores on v7x (no-op on single-TC v5e/v6e).
    tb = min(block_b, _round_up(B, sub))
    if B > sub:
        tb = min(tb, _round_up(-(-B // 2), sub))
    tb = max(sub, tb)
    b_p = _round_up(B, tb)

    f32 = jnp.float32
    xp = _pad2(x.astype(w_dtype), b_p, d_in)                       # rows only
    w1 = _pad2(params["w1"].astype(w_dtype), d_in, d_h_p)
    w2 = _pad2(params["w2"].astype(w_dtype), d_h_p, d_h_p)
    w3 = _pad2(params["w3"].astype(w_dtype), d_h_p, d_h_p)
    w4 = _pad2(params["w4"].astype(w_dtype), d_h_p, d_out_p)
    b1 = _pad2(params["b1"].astype(f32), 1, d_h_p)                 # biases stay f32
    b2 = _pad2(params["b2"].astype(f32), 1, d_h_p)
    b3 = _pad2(params["b3"].astype(f32), 1, d_h_p)
    b4 = _pad2(params["b4"].astype(f32), 1, d_out_p)

    grid = (b_p // tb,)

    x_spec = pl.BlockSpec((tb, d_in), lambda i: (i, 0))
    out_spec = pl.BlockSpec((tb, d_out_p), lambda i: (i, 0))

    def resident(a, single_buffer):
        # Constant index_map -> fetched once, stays VMEM-resident across the
        # grid.  Buffered(1) halves its VMEM footprint (no useless 2nd buffer).
        if single_buffer:
            return pl.BlockSpec(a.shape, lambda i: (0, 0),
                                pipeline_mode=pl.Buffered(1))
        return pl.BlockSpec(a.shape, lambda i: (0, 0))

    operands = (xp, w1, b1, w2, b2, w3, b3, w4, b4)
    flops = 2 * b_p * (d_in * d_h_p + 2 * d_h_p * d_h_p + d_h_p * d_out_p)
    bytes_accessed = (sum(int(a.size) * a.dtype.itemsize for a in operands)
                      + b_p * d_out_p * 4)

    def run(single_buffer_weights):
        in_specs = [x_spec]
        for w, b in ((w1, b1), (w2, b2), (w3, b3), (w4, b4)):
            in_specs.append(resident(w, single_buffer_weights))
            in_specs.append(resident(b, single_buffer_weights))
        return pl.pallas_call(
            mlp_kernel,
            out_shape=jax.ShapeDtypeStruct((b_p, d_out_p), jnp.float32),
            grid=grid,
            in_specs=in_specs,
            out_specs=out_spec,
            compiler_params=pltpu.CompilerParams(
                dimension_semantics=("parallel",),   # dual-TC on v7x
                vmem_limit_bytes=_vmem_limit_bytes()),
            cost_estimate=pl.CostEstimate(
                flops=flops, transcendentals=0, bytes_accessed=bytes_accessed),
        )(*operands)

    try:
        out_p = run(True)     # single-buffered resident weights (preferred)
    except Exception:
        out_p = run(False)    # safe fallback: default double buffering

    return out_p[:B, :d_out]


def init_params(key, input_dim, hidden_dim, output_dim):
    """Mimics PyTorch nn.Linear default init: U(-1/sqrt(fan_in), 1/sqrt(fan_in))."""
    dims = [(input_dim, hidden_dim),
            (hidden_dim, hidden_dim),
            (hidden_dim, hidden_dim),
            (hidden_dim, output_dim)]
    params = {}
    keys = jax.random.split(key, 2 * len(dims))
    for i, (fan_in, fan_out) in enumerate(dims):
        bound = 1.0 / (fan_in ** 0.5)
        params[f"w{i+1}"] = jax.random.uniform(
            keys[2 * i], (fan_in, fan_out), jnp.float32, -bound, bound)
        params[f"b{i+1}"] = jax.random.uniform(
            keys[2 * i + 1], (1, fan_out), jnp.float32, -bound, bound)
    return params


def mlp_reference(x, params):
    h = x
    for i in range(1, 4):
        h = jnp.maximum(h @ params[f"w{i}"] + params[f"b{i}"], 0.0)
    return h @ params["w4"] + params["b4"]


if __name__ == "__main__":
    key = jax.random.PRNGKey(0)
    k_x, k_p = jax.random.split(key)

    B, input_dim, hidden_dim, output_dim = 8, 16, 32, 8
    x = jax.random.normal(k_x, (B, input_dim), jnp.float32)
    params = init_params(k_p, input_dim, hidden_dim, output_dim)

    ref = mlp_reference(x, params)

    # Exact f32 path.
    out_f32 = jax.block_until_ready(mlp_forward(x, params, use_bf16=False))
    assert out_f32.shape == (B, output_dim)
    assert jnp.allclose(out_f32, ref, atol=1e-5, rtol=1e-5)

    # Default fast path: bf16 MXU operands, f32 accumulation (looser tolerance).
    out_bf16 = jax.block_until_ready(mlp_forward(x, params))
    assert out_bf16.shape == (B, output_dim)
    assert jnp.allclose(out_bf16, ref, atol=5e-2, rtol=5e-2)

    print("KERNEL_OK")
</pallas_src>

<mosaic_0001>
module attributes {stable_mosaic.version = 11 : i64} {
  func.func @mlp_kernel(%arg0: i32, %arg1: memref<8x16xf32, #tpu.memory_space<vmem>>, %arg2: memref<16x128xf32, #tpu.memory_space<vmem>>, %arg3: memref<1x128xf32, #tpu.memory_space<vmem>>, %arg4: memref<128x128xf32, #tpu.memory_space<vmem>>, %arg5: memref<1x128xf32, #tpu.memory_space<vmem>>, %arg6: memref<128x128xf32, #tpu.memory_space<vmem>>, %arg7: memref<1x128xf32, #tpu.memory_space<vmem>>, %arg8: memref<128x128xf32, #tpu.memory_space<vmem>>, %arg9: memref<1x128xf32, #tpu.memory_space<vmem>>, %arg10: memref<8x128xf32, #tpu.memory_space<vmem>>) attributes {dimension_semantics = [#tpu.dimension_semantics<parallel>], iteration_bounds = array<i64: 1>, scalar_prefetch = 0 : i64, scratch_operands = 0 : i64, tpu.core_type = #tpu.core_type<tc>, window_params = [{transform_indices = @transform_0, window_bounds = array<i64: 8, 16>}, {pipeline_mode = #tpu.pipeline_mode<synchronous>, transform_indices = @transform_1, window_bounds = array<i64: 16, 128>}, {pipeline_mode = #tpu.pipeline_mode<synchronous>, transform_indices = @transform_2, window_bounds = array<i64: 1, 128>}, {pipeline_mode = #tpu.pipeline_mode<synchronous>, transform_indices = @transform_3, window_bounds = array<i64: 128, 128>}, {pipeline_mode = #tpu.pipeline_mode<synchronous>, transform_indices = @transform_4, window_bounds = array<i64: 1, 128>}, {pipeline_mode = #tpu.pipeline_mode<synchronous>, transform_indices = @transform_5, window_bounds = array<i64: 128, 128>}, {pipeline_mode = #tpu.pipeline_mode<synchronous>, transform_indices = @transform_6, window_bounds = array<i64: 1, 128>}, {pipeline_mode = #tpu.pipeline_mode<synchronous>, transform_indices = @transform_7, window_bounds = array<i64: 128, 128>}, {pipeline_mode = #tpu.pipeline_mode<synchronous>, transform_indices = @transform_8, window_bounds = array<i64: 1, 128>}, {transform_indices = @transform_9, window_bounds = array<i64: 8, 128>}]} {
    %c0 = arith.constant 0 : index
    %c0_0 = arith.constant 0 : index
    %0 = vector.load %arg1[%c0, %c0_0] : memref<8x16xf32, #tpu.memory_space<vmem>>, vector<8x16xf32>
    %c0_1 = arith.constant 0 : index
    %c0_2 = arith.constant 0 : index
    %1 = vector.load %arg2[%c0_1, %c0_2] : memref<16x128xf32, #tpu.memory_space<vmem>>, vector<16x128xf32>
    %cst = arith.constant dense<0.000000e+00> : vector<8x128xf32>
    %2 = tpu.matmul %0, %1, %cst {dimension_numbers = #tpu.dot_dimension_numbers<[1], [0], [0], [1], [0, 0, 1, 1], [], []>} : vector<8x16xf32>, vector<16x128xf32>, vector<8x128xf32> -> vector<8x128xf32>
    %c0_3 = arith.constant 0 : index
    %c0_4 = arith.constant 0 : index
    %3 = vector.load %arg3[%c0_3, %c0_4] : memref<1x128xf32, #tpu.memory_space<vmem>>, vector<1x128xf32>
    %4 = vector.broadcast %3 : vector<1x128xf32> to vector<8x128xf32>
    %5 = arith.addf %2, %4 : vector<8x128xf32>
    %cst_5 = arith.constant 0.000000e+00 : f32
    %6 = vector.broadcast %cst_5 : f32 to vector<8x128xf32>
    %7 = arith.maximumf %5, %6 : vector<8x128xf32>
    %c0_6 = arith.constant 0 : index
    %c0_7 = arith.constant 0 : index
    %8 = vector.load %arg4[%c0_6, %c0_7] : memref<128x128xf32, #tpu.memory_space<vmem>>, vector<128x128xf32>
    %cst_8 = arith.constant dense<0.000000e+00> : vector<8x128xf32>
    %9 = tpu.matmul %7, %8, %cst_8 {dimension_numbers = #tpu.dot_dimension_numbers<[1], [0], [0], [1], [0, 0, 1, 1], [], []>} : vector<8x128xf32>, vector<128x128xf32>, vector<8x128xf32> -> vector<8x128xf32>
    %c0_9 = arith.constant 0 : index
    %c0_10 = arith.constant 0 : index
    %10 = vector.load %arg5[%c0_9, %c0_10] : memref<1x128xf32, #tpu.memory_space<vmem>>, vector<1x128xf32>
    %11 = vector.broadcast %10 : vector<1x128xf32> to vector<8x128xf32>
    %12 = arith.addf %9, %11 : vector<8x128xf32>
    %cst_11 = arith.constant 0.000000e+00 : f32
    %13 = vector.broadcast %cst_11 : f32 to vector<8x128xf32>
    %14 = arith.maximumf %12, %13 : vector<8x128xf32>
    %c0_12 = arith.constant 0 : index
    %c0_13 = arith.constant 0 : index
    %15 = vector.load %arg6[%c0_12, %c0_13] : memref<128x128xf32, #tpu.memory_space<vmem>>, vector<128x128xf32>
    %cst_14 = arith.constant dense<0.000000e+00> : vector<8x128xf32>
    %16 = tpu.matmul %14, %15, %cst_14 {dimension_numbers = #tpu.dot_dimension_numbers<[1], [0], [0], [1], [0, 0, 1, 1], [], []>} : vector<8x128xf32>, vector<128x128xf32>, vector<8x128xf32> -> vector<8x128xf32>
    %c0_15 = arith.constant 0 : index
    %c0_16 = arith.constant 0 : index
    %17 = vector.load %arg7[%c0_15, %c0_16] : memref<1x128xf32, #tpu.memory_space<vmem>>, vector<1x128xf32>
    %18 = vector.broadcast %17 : vector<1x128xf32> to vector<8x128xf32>
    %19 = arith.addf %16, %18 : vector<8x128xf32>
    %cst_17 = arith.constant 0.000000e+00 : f32
    %20 = vector.broadcast %cst_17 : f32 to vector<8x128xf32>
    %21 = arith.maximumf %19, %20 : vector<8x128xf32>
    %c0_18 = arith.constant 0 : index
    %c0_19 = arith.constant 0 : index
    %22 = vector.load %arg8[%c0_18, %c0_19] : memref<128x128xf32, #tpu.memory_space<vmem>>, vector<128x128xf32>
    %cst_20 = arith.constant dense<0.000000e+00> : vector<8x128xf32>
    %23 = tpu.matmul %21, %22, %cst_20 {dimension_numbers = #tpu.dot_dimension_numbers<[1], [0], [0], [1], [0, 0, 1, 1], [], []>} : vector<8x128xf32>, vector<128x128xf32>, vector<8x128xf32> -> vector<8x128xf32>
    %c0_21 = arith.constant 0 : index
    %c0_22 = arith.constant 0 : index
    %24 = vector.load %arg9[%c0_21, %c0_22] : memref<1x128xf32, #tpu.memory_space<vmem>>, vector<1x128xf32>
    %25 = vector.broadcast %24 : vector<1x128xf32> to vector<8x128xf32>
    %26 = arith.addf %23, %25 : vector<8x128xf32>
    %c0_23 = arith.constant 0 : index
    %c0_24 = arith.constant 0 : index
    %27 = vector.load %arg10[%c0_23, %c0_24] : memref<8x128xf32, #tpu.memory_space<vmem>>, vector<8x128xf32>
    tpu.vector_store %arg10[%c0_23, %c0_24], %26 {strides = array<i32>} : memref<8x128xf32, #tpu.memory_space<vmem>>, vector<8x128xf32>,
    return
  }
  func.func @transform_0(%arg0: i32) -> (i32, i32) {
    %c0_i32 = arith.constant 0 : i32
    %c0_i32_0 = arith.constant 0 : i32
    return %arg0, %c0_i32 : i32, i32
  }
  func.func @transform_1(%arg0: i32) -> (i32, i32) {
    %c0_i32 = arith.constant 0 : i32
    %c0_i32_0 = arith.constant 0 : i32
    %c0_i32_1 = arith.constant 0 : i32
    return %c0_i32, %c0_i32_0 : i32, i32
  }
  func.func @transform_2(%arg0: i32) -> (i32, i32) {
    %c0_i32 = arith.constant 0 : i32
    %c0_i32_0 = arith.constant 0 : i32
    %c0_i32_1 = arith.constant 0 : i32
    return %c0_i32, %c0_i32_0 : i32, i32
  }
  func.func @transform_3(%arg0: i32) -> (i32, i32) {
    %c0_i32 = arith.constant 0 : i32
    %c0_i32_0 = arith.constant 0 : i32
    %c0_i32_1 = arith.constant 0 : i32
    return %c0_i32, %c0_i32_0 : i32, i32
  }
  func.func @transform_4(%arg0: i32) -> (i32, i32) {
    %c0_i32 = arith.constant 0 : i32
    %c0_i32_0 = arith.constant 0 : i32
    %c0_i32_1 = arith.constant 0 : i32
    return %c0_i32, %c0_i32_0 : i32, i32
  }
  func.func @transform_5(%arg0: i32) -> (i32, i32) {
    %c0_i32 = arith.constant 0 : i32
    %c0_i32_0 = arith.constant 0 : i32
    %c0_i32_1 = arith.constant 0 : i32
    return %c0_i32, %c0_i32_0 : i32, i32
  }
  func.func @transform_6(%arg0: i32) -> (i32, i32) {
    %c0_i32 = arith.constant 0 : i32
    %c0_i32_0 = arith.constant 0 : i32
    %c0_i32_1 = arith.constant 0 : i32
    return %c0_i32, %c0_i32_0 : i32, i32
  }
  func.func @transform_7(%arg0: i32) -> (i32, i32) {
    %c0_i32 = arith.constant 0 : i32
    %c0_i32_0 = arith.constant 0 : i32
    %c0_i32_1 = arith.constant 0 : i32
    return %c0_i32, %c0_i32_0 : i32, i32
  }
  func.func @transform_8(%arg0: i32) -> (i32, i32) {
    %c0_i32 = arith.constant 0 : i32
    %c0_i32_0 = arith.constant 0 : i32
    %c0_i32_1 = arith.constant 0 : i32
    return %c0_i32, %c0_i32_0 : i32, i32
  }
  func.func @transform_9(%arg0: i32) -> (i32, i32) {
    %c0_i32 = arith.constant 0 : i32
    %c0_i32_0 = arith.constant 0 : i32
    return %arg0, %c0_i32 : i32, i32
  }
}

module attributes {stable_mosaic.version = 11 : i64} {
  func.func @mlp_kernel(%arg0: i32, %arg1: memref<8x16xf32, #tpu.memory_space<vmem>>, %arg2: memref<16x128xf32, #tpu.memory_space<vmem>>, %arg3: memref<1x128xf32, #tpu.memory_space<vmem>>, %arg4: memref<128x128xf32, #tpu.memory_space<vmem>>, %arg5: memref<1x128xf32, #tpu.memory_space<vmem>>, %arg6: memref<128x128xf32, #tpu.memory_space<vmem>>, %arg7: memref<1x128xf32, #tpu.memory_space<vmem>>, %arg8: memref<128x128xf32, #tpu.memory_space<vmem>>, %arg9: memref<1x128xf32, #tpu.memory_space<vmem>>, %arg10: memref<8x128xf32, #tpu.memory_space<vmem>>) attributes {dimension_semantics = [#tpu.dimension_semantics<parallel>], iteration_bounds = array<i64: 1>, scalar_prefetch = 0 : i64, scratch_operands = 0 : i64, tpu.core_type = #tpu.core_type<tc>, window_params = [{transform_indices = @transform_0, window_bounds = array<i64: 8, 16>}, {pipeline_mode = #tpu.pipeline_mode<synchronous>, transform_indices = @transform_1, window_bounds = array<i64: 16, 128>}, {pipeline_mode = #tpu.pipeline_mode<synchronous>, transform_indices = @transform_2, window_bounds = array<i64: 1, 128>}, {pipeline_mode = #tpu.pipeline_mode<synchronous>, transform_indices = @transform_3, window_bounds = array<i64: 128, 128>}, {pipeline_mode = #tpu.pipeline_mode<synchronous>, transform_indices = @transform_4, window_bounds = array<i64: 1, 128>}, {pipeline_mode = #tpu.pipeline_mode<synchronous>, transform_indices = @transform_5, window_bounds = array<i64: 128, 128>}, {pipeline_mode = #tpu.pipeline_mode<synchronous>, transform_indices = @transform_6, window_bounds = array<i64: 1, 128>}, {pipeline_mode = #tpu.pipeline_mode<synchronous>, transform_indices = @transform_7, window_bounds = array<i64: 128, 128>}, {pipeline_mode = #tpu.pipeline_mode<synchronous>, transform_indices = @transform_8, window_bounds = array<i64: 1, 128>}, {transform_indices = @transform_9, window_bounds = array<i64: 8, 128>}]} {
    %c0 = arith.constant 0 : index
    %c0_0 = arith.constant 0 : index
    %0 = vector.load %arg1[%c0, %c0_0] : memref<8x16xf32, #tpu.memory_space<vmem>>, vector<8x16xf32>
    %c0_1 = arith.constant 0 : index
    %c0_2 = arith.constant 0 : index
    %1 = vector.load %arg2[%c0_1, %c0_2] : memref<16x128xf32, #tpu.memory_space<vmem>>, vector<16x128xf32>
    %cst = arith.constant dense<0.000000e+00> : vector<8x128xf32>
    %2 = tpu.matmul %0, %1, %cst {dimension_numbers = #tpu.dot_dimension_numbers<[1], [0], [0], [1], [0, 0, 1, 1], [], []>} : vector<8x16xf32>, vector<16x128xf32>, vector<8x128xf32> -> vector<8x128xf32>
    %c0_3 = arith.constant 0 : index
    %c0_4 = arith.constant 0 : index
    %3 = vector.load %arg3[%c0_3, %c0_4] : memref<1x128xf32, #tpu.memory_space<vmem>>, vector<1x128xf32>
    %4 = vector.broadcast %3 : vector<1x128xf32> to vector<8x128xf32>
    %5 = arith.addf %2, %4 : vector<8x128xf32>
    %cst_5 = arith.constant 0.000000e+00 : f32
    %6 = vector.broadcast %cst_5 : f32 to vector<8x128xf32>
    %7 = arith.maximumf %5, %6 : vector<8x128xf32>
    %c0_6 = arith.constant 0 : index
    %c0_7 = arith.constant 0 : index
    %8 = vector.load %arg4[%c0_6, %c0_7] : memref<128x128xf32, #tpu.memory_space<vmem>>, vector<128x128xf32>
    %cst_8 = arith.constant dense<0.000000e+00> : vector<8x128xf32>
    %9 = tpu.matmul %7, %8, %cst_8 {dimension_numbers = #tpu.dot_dimension_numbers<[1], [0], [0], [1], [0, 0, 1, 1], [], []>} : vector<8x128xf32>, vector<128x128xf32>, vector<8x128xf32> -> vector<8x128xf32>
    %c0_9 = arith.constant 0 : index
    %c0_10 = arith.constant 0 : index
    %10 = vector.load %arg5[%c0_9, %c0_10] : memref<1x128xf32, #tpu.memory_space<vmem>>, vector<1x128xf32>
    %11 = vector.broadcast %10 : vector<1x128xf32> to vector<8x128xf32>
    %12 = arith.addf %9, %11 : vector<8x128xf32>
    %cst_11 = arith.constant 0.000000e+00 : f32
    %13 = vector.broadcast %cst_11 : f32 to vector<8x128xf32>
    %14 = arith.maximumf %12, %13 : vector<8x128xf32>
    %c0_12 = arith.constant 0 : index
    %c0_13 = arith.constant 0 : index
    %15 = vector.load %arg6[%c0_12, %c0_13] : memref<128x128xf32, #tpu.memory_space<vmem>>, vector<128x128xf32>
    %cst_14 = arith.constant dense<0.000000e+00> : vector<8x128xf32>
    %16 = tpu.matmul %14, %15, %cst_14 {dimension_numbers = #tpu.dot_dimension_numbers<[1], [0], [0], [1], [0, 0, 1, 1], [], []>} : vector<8x128xf32>, vector<128x128xf32>, vector<8x128xf32> -> vector<8x128xf32>
    %c0_15 = arith.constant 0 : index
    %c0_16 = arith.constant 0 : index
    %17 = vector.load %arg7[%c0_15, %c0_16] : memref<1x128xf32, #tpu.memory_space<vmem>>, vector<1x128xf32>
    %18 = vector.broadcast %17 : vector<1x128xf32> to vector<8x128xf32>
    %19 = arith.addf %16, %18 : vector<8x128xf32>
    %cst_17 = arith.constant 0.000000e+00 : f32
    %20 = vector.broadcast %cst_17 : f32 to vector<8x128xf32>
    %21 = arith.maximumf %19, %20 : vector<8x128xf32>
    %c0_18 = arith.constant 0 : index
    %c0_19 = arith.constant 0 : index
    %22 = vector.load %arg8[%c0_18, %c0_19] : memref<128x128xf32, #tpu.memory_space<vmem>>, vector<128x128xf32>
    %cst_20 = arith.constant dense<0.000000e+00> : vector<8x128xf32>
    %23 = tpu.matmul %21, %22, %cst_20 {dimension_numbers = #tpu.dot_dimension_numbers<[1], [0], [0], [1], [0, 0, 1, 1], [], []>} : vector<8x128xf32>, vector<128x128xf32>, vector<8x128xf32> -> vector<8x128xf32>
    %c0_21 = arith.constant 0 : index
    %c0_22 = arith.constant 0 : index
    %24 = vector.load %arg9[%c0_21, %c0_22] : memref<1x128xf32, #tpu.memory_space<vmem>>, vector<1x128xf32>
    %25 = vector.broadcast %24 : vector<1x128xf32> to vector<8x128xf32>
    %26 = arith.addf %23, %25 : vector<8x128xf32>
    %c0_23 = arith.constant 0 : index
    %c0_24 = arith.constant 0 : index
    %27 = vector.load %arg10[%c0_23, %c0_24] : memref<8x128xf32, #tpu.memory_space<vmem>>, vector<8x128xf32>
    tpu.vector_store %arg10[%c0_23, %c0_24], %26 {strides = array<i32>} : memref<8x128xf32, #tpu.memory_space<vmem>>, vector<8x128xf32>,
    return
  }
  func.func @transform_0(%arg0: i32) -> (i32, i32) {
    %c0_i32 = arith.constant 0 : i32
    %c0_i32_0 = arith.constant 0 : i32
    return %arg0, %c0_i32 : i32, i32
  }
  func.func @transform_1(%arg0: i32) -> (i32, i32) {
    %c0_i32 = arith.constant 0 : i32
    %c0_i32_0 = arith.constant 0 : i32
    %c0_i32_1 = arith.constant 0 : i32
    return %c0_i32, %c0_i32_0 : i32, i32
  }
  func.func @transform_2(%arg0: i32) -> (i32, i32) {
    %c0_i32 = arith.constant 0 : i32
    %c0_i32_0 = arith.constant 0 : i32
    %c0_i32_1 = arith.constant 0 : i32
    return %c0_i32, %c0_i32_0 : i32, i32
  }
  func.func @transform_3(%arg0: i32) -> (i32, i32) {
    %c0_i32 = arith.constant 0 : i32
    %c0_i32_0 = arith.constant 0 : i32
    %c0_i32_1 = arith.constant 0 : i32
    return %c0_i32, %c0_i32_0 : i32, i32
  }
  func.func @transform_4(%arg0: i32) -> (i32, i32) {
    %c0_i32 = arith.constant 0 : i32
    %c0_i32_0 = arith.constant 0 : i32
    %c0_i32_1 = arith.constant 0 : i32
    return %c0_i32, %c0_i32_0 : i32, i32
  }
  func.func @transform_5(%arg0: i32) -> (i32, i32) {
    %c0_i32 = arith.constant 0 : i32
    %c0_i32_0 = arith.constant 0 : i32
    %c0_i32_1 = arith.constant 0 : i32
    return %c0_i32, %c0_i32_0 : i32, i32
  }
  func.func @transform_6(%arg0: i32) -> (i32, i32) {
    %c0_i32 = arith.constant 0 : i32
    %c0_i32_0 = arith.constant 0 : i32
    %c0_i32_1 = arith.constant 0 : i32
    return %c0_i32, %c0_i32_0 : i32, i32
  }
  func.func @transform_7(%arg0: i32) -> (i32, i32) {
    %c0_i32 = arith.constant 0 : i32
    %c0_i32_0 = arith.constant 0 : i32
    %c0_i32_1 = arith.constant 0 : i32
    return %c0_i32, %c0_i32_0 : i32, i32
  }
  func.func @transform_8(%arg0: i32) -> (i32, i32) {
    %c0_i32 = arith.constant 0 : i32
    %c0_i32_0 = arith.constant 0 : i32
    %c0_i32_1 = arith.constant 0 : i32
    return %c0_i32, %c0_i32_0 : i32, i32
  }
  func.func @transform_9(%arg0: i32) -> (i32, i32) {
    %c0_i32 = arith.constant 0 : i32
    %c0_i32_0 = arith.constant 0 : i32
    return %arg0, %c0_i32 : i32, i32
  }
}

</mosaic_0001>

<llo_original>
// kernel: tpu_custom_call.1
$region0: #{tpu_custom_call.1}
  #allocation0 [shape = 'u32[]', space=smem, size = 0x4, offset = 0x4, fixed_abs, tag = 'smem constant byte address 0x4 - core index']
  #allocation1 [shape = 'u32[72,128]{1,0:T(1,128)}', space=vmem, size = 0x9000, scoped, tag = 'internal scratch']
  %s0 = inlined_call_operand.hbm [shape: f32[8,16], index: 0, kind: input, shape index: {}]
  %s1 = inlined_call_operand.hbm [shape: f32[16,128], index: 1, kind: input, shape index: {}]
  %s2 = inlined_call_operand.vmem [shape: f32[1,128], index: 2, kind: input, shape index: {}]
  %s3 = inlined_call_operand.hbm [shape: f32[128,128], index: 3, kind: input, shape index: {}]
  %s4 = inlined_call_operand.vmem [shape: f32[1,128], index: 4, kind: input, shape index: {}]
  %s5 = inlined_call_operand.hbm [shape: f32[128,128], index: 5, kind: input, shape index: {}]
  %s6 = inlined_call_operand.vmem [shape: f32[1,128], index: 6, kind: input, shape index: {}]
  %s7 = inlined_call_operand.hbm [shape: f32[128,128], index: 7, kind: input, shape index: {}]
  %s8 = inlined_call_operand.vmem [shape: f32[1,128], index: 8, kind: input, shape index: {}]
  %s9 = inlined_call_operand.hbm [shape: f32[8,128], index: 9, kind: output, shape index: {}]
  %s10 = sld [smem:[#allocation0]]
  $region66: #{tpu_custom_call.1} parent=0
    _
  %s12 = ssub.s32 1, %s10
  %s13 = scalar_select 0, %s12, %s10
  $region1: #{tpu_custom_call.1} parent=0
    #allocation2 [shape = 'u8[4096]{0}', space=vmem, size = 0x1000, scoped, tag = 'input window, operand 0, single buffered']
    #allocation3 [shape = 's32[1]{0}', space=sflag, size = 0x4, scoped, tag = 'scoped memory for tpu_custom_call.1']
    #allocation4 [shape = 's32[1]{0}', space=sflag, size = 0x4, scoped, tag = 'scoped memory for tpu_custom_call.1']
    #allocation5 [shape = 'u8[8192]{0}', space=vmem, size = 0x2000, scoped, tag = 'input window, operand 1, single buffered']
    #allocation6 [shape = 's32[1]{0}', space=sflag, size = 0x4, scoped, tag = 'scoped memory for tpu_custom_call.1']
    #allocation7 [shape = 'u8[65536]{0}', space=vmem, size = 0x10000, scoped, tag = 'input window, operand 3, single buffered']
    #allocation8 [shape = 'u8[65536]{0}', space=vmem, size = 0x10000, scoped, tag = 'input window, operand 5, single buffered']
    #allocation9 [shape = 's32[1]{0}', space=sflag, size = 0x4, scoped, tag = 'scoped memory for tpu_custom_call.1']
    #allocation10 [shape = 'u8[65536]{0}', space=vmem, size = 0x10000, scoped, tag = 'input window, operand 7, single buffered']
    #allocation11 [shape = 'u8[4096]{0}', space=vmem, size = 0x1000, scoped, tag = 'output window, operand 0, single buffered']
    %14 = vsyncpa [#allocation3], 0
    %15 = vsyncpa [#allocation6], 0
    %16 = vsyncpa [#allocation9], 0
    %17 = vsyncpa [#allocation4], 0
    // Predicated region
    $region2: #{tpu_custom_call.1} parent=1 // pred_check
      _
    $region3: #{tpu_custom_call.1} parent=1 // pred_check_branch
      %19 = sbr.rel (0) target = $region5
    $region4: #{tpu_custom_call.1} parent=1 // pred_region
      %21 = vsyncadd [#allocation3], 0
      %s23 = sshll.u32 %s0, 4
      %s24 = int_to_ptr.hbm [resolvable:$true] %s23
      %s25 = sshll.u32 [#allocation2], 4
      %s26 = int_to_ptr.vmem [resolvable:$true] %s25
      %28 = dma.hbm_to_vmem [thread:$0]  %s24, 128, %s26, [#allocation3]
    $region5: #{tpu_custom_call.1} parent=1 // pred_fallthru
      _
    // Predicated region
    $region6: #{tpu_custom_call.1} parent=1 // pred_check
      _
    $region7: #{tpu_custom_call.1} parent=1 // pred_check_branch
      %30 = sbr.rel (0) target = $region9
    $region8: #{tpu_custom_call.1} parent=1 // pred_region
      %32 = vsyncadd [#allocation6], 0
      %s33 = sshll.u32 %s1, 4
      %s34 = int_to_ptr.hbm [resolvable:$true] %s33
      %s35 = sshll.u32 [#allocation5], 4
      %s36 = int_to_ptr.vmem [resolvable:$true] %s35
      %41 = dma.hbm_to_vmem [thread:$0]  %s34, 256, %s36, [#allocation6], 128, 128, 8
    $region9: #{tpu_custom_call.1} parent=1 // pred_fallthru
      _
    // Predicated region
    $region10: #{tpu_custom_call.1} parent=1 // pred_check
      _
    $region11: #{tpu_custom_call.1} parent=1 // pred_check_branch
      %43 = sbr.rel (0) target = $region13
    $region12: #{tpu_custom_call.1} parent=1 // pred_region
      _
    $region13: #{tpu_custom_call.1} parent=1 // pred_fallthru
      _
    // Predicated region
    $region14: #{tpu_custom_call.1} parent=1 // pred_check
      _
    $region15: #{tpu_custom_call.1} parent=1 // pred_check_branch
      %45 = sbr.rel (0) target = $region17
    $region16: #{tpu_custom_call.1} parent=1 // pred_region
      %47 = vsyncadd [#allocation6], 0
      %s48 = sshll.u32 %s3, 4
      %s49 = int_to_ptr.hbm [resolvable:$true] %s48
      %s50 = sshll.u32 [#allocation7], 4
      %s51 = int_to_ptr.vmem [resolvable:$true] %s50
      %56 = dma.hbm_to_vmem [thread:$0]  %s49, 2048, %s51, [#allocation6], 128, 128, 8
    $region17: #{tpu_custom_call.1} parent=1 // pred_fallthru
      _
    // Predicated region
    $region18: #{tpu_custom_call.1} parent=1 // pred_check
      _
    $region19: #{tpu_custom_call.1} parent=1 // pred_check_branch
      %58 = sbr.rel (0) target = $region21
    $region20: #{tpu_custom_call.1} parent=1 // pred_region
      _
    $region21: #{tpu_custom_call.1} parent=1 // pred_fallthru
      _
    // Predicated region
    $region22: #{tpu_custom_call.1} parent=1 // pred_check
      _
    $region23: #{tpu_custom_call.1} parent=1 // pred_check_branch
      %60 = sbr.rel (0) target = $region25
    $region24: #{tpu_custom_call.1} parent=1 // pred_region
      %62 = vsyncadd [#allocation9], 0
      %s63 = sshll.u32 %s5, 4
      %s64 = int_to_ptr.hbm [resolvable:$true] %s63
      %s65 = sshll.u32 [#allocation8], 4
      %s66 = int_to_ptr.vmem [resolvable:$true] %s65
      %71 = dma.hbm_to_vmem [thread:$0]  %s64, 2048, %s66, [#allocation9], 128, 128, 8
    $region25: #{tpu_custom_call.1} parent=1 // pred_fallthru
      _
    // Predicated region
    $region26: #{tpu_custom_call.1} parent=1 // pred_check
      _
    $region27: #{tpu_custom_call.1} parent=1 // pred_check_branch
      %73 = sbr.rel (0) target = $region29
    $region28: #{tpu_custom_call.1} parent=1 // pred_region
      _
    $region29: #{tpu_custom_call.1} parent=1 // pred_fallthru
      _
    // Predicated region
    $region30: #{tpu_custom_call.1} parent=1 // pred_check
      _
    $region31: #{tpu_custom_call.1} parent=1 // pred_check_branch
      %75 = sbr.rel (0) target = $region33
    $region32: #{tpu_custom_call.1} parent=1 // pred_region
      %77 = vsyncadd [#allocation9], 0
      %s78 = sshll.u32 %s7, 4
      %s79 = int_to_ptr.hbm [resolvable:$true] %s78
      %s80 = sshll.u32 [#allocation10], 4
      %s81 = int_to_ptr.vmem [resolvable:$true] %s80
      %86 = dma.hbm_to_vmem [thread:$0]  %s79, 2048, %s81, [#allocation9], 128, 128, 8
    $region33: #{tpu_custom_call.1} parent=1 // pred_fallthru
      _
    // Predicated region
    $region34: #{tpu_custom_call.1} parent=1 // pred_check
      _
    $region35: #{tpu_custom_call.1} parent=1 // pred_check_branch
      %88 = sbr.rel (0) target = $region37
    $region36: #{tpu_custom_call.1} parent=1 // pred_region
      _
    $region37: #{tpu_custom_call.1} parent=1 // pred_fallthru
      _
    // Predicated region
    $region38: #{tpu_custom_call.1} parent=1 // pred_check
      _
    $region39: #{tpu_custom_call.1} parent=1 // pred_check_branch
      %90 = sbr.rel (0) target = $region41
    $region40: #{tpu_custom_call.1} parent=1 // pred_region
      %92 = dma.done [#allocation3], 128
    $region41: #{tpu_custom_call.1} parent=1 // pred_fallthru
      _
    // Predicated region
    $region42: #{tpu_custom_call.1} parent=1 // pred_check
      _
    $region43: #{tpu_custom_call.1} parent=1 // pred_check_branch
      %94 = sbr.rel (0) target = $region45
    $region44: #{tpu_custom_call.1} parent=1 // pred_region
      %96 = dma.done [#allocation6], 256
    $region45: #{tpu_custom_call.1} parent=1 // pred_fallthru
      _
    // Predicated region
    $region46: #{tpu_custom_call.1} parent=1 // pred_check
      _
    $region47: #{tpu_custom_call.1} parent=1 // pred_check_branch
      %98 = sbr.rel (0) target = $region49
    $region48: #{tpu_custom_call.1} parent=1 // pred_region
      %100 = dma.done [#allocation6], 2048
    $region49: #{tpu_custom_call.1} parent=1 // pred_fallthru
      _
    // Predicated region
    $region50: #{tpu_custom_call.1} parent=1 // pred_check
      _
    $region51: #{tpu_custom_call.1} parent=1 // pred_check_branch
      %102 = sbr.rel (0) target = $region53
    $region52: #{tpu_custom_call.1} parent=1 // pred_region
      %104 = dma.done [#allocation9], 2048
    $region53: #{tpu_custom_call.1} parent=1 // pred_fallthru
      _
    // Predicated region
    $region54: #{tpu_custom_call.1} parent=1 // pred_check
      _
    $region55: #{tpu_custom_call.1} parent=1 // pred_check_branch
      %106 = sbr.rel (0) target = $region57
    $region56: #{tpu_custom_call.1} parent=1 // pred_region
      %108 = dma.done [#allocation9], 2048
    $region57: #{tpu_custom_call.1} parent=1 // pred_fallthru
      _
    %v109 = vld [vmem:[#allocation2] sm:$0xff]
    %v110 = vld [vmem:[#allocation5] sm:$0xff]
    %v111 = vld [vmem:[#allocation5 + $0x8] sm:$0xff]
    %v112 = vld [vmem:[%s2] sm:$0x1]
    %v114 = vperm.slane %v112, 0
    %vm116 = vcmask 130048
    %v118 = vsel %vm116, %v109, 0
    %120 = vmatpush.msra.mxu0 0.0
    %121 = vmatpush.msra.mxu0 0.0
    %122 = vmatpush.msra.mxu0 0.0
    %123 = vmatpush.msra.mxu0 0.0
    %124 = vmatpush.msra.mxu0 0.0
    %125 = vmatpush.msra.mxu0 0.0
    %126 = vmatpush.msra.mxu0 0.0
    %127 = vmatpush.msra.mxu0 0.0
    %128 = vmatpush.msra.mxu0 0.0
    %129 = vmatpush.msra.mxu0 0.0
    %130 = vmatpush.msra.mxu0 0.0
    %131 = vmatpush.msra.mxu0 0.0
    %132 = vmatpush.msra.mxu0 0.0
    %133 = vmatpush.msra.mxu0 0.0
    %134 = vmatpush.msra.mxu0 %v111
    %135 = vmatpush.msra.mxu0 %v110
    %136 = vmatmul.f32.gmra.mxu0 %v118
    %v137 = vpop.f32.mrf.mxu0
    %v138 = vadd.f32 %v114, %v137
    %139 = vdwg.mxu0
    %v140 = vmax.f32 %v138, 0.0
    %v141 = vld [vmem:[#allocation7] sm:$0xff]
    %v142 = vld [vmem:[#allocation7 + $0x8] sm:$0xff]
    %v143 = vld [vmem:[#allocation7 + $0x10] sm:$0xff]
    %v144 = vld [vmem:[#allocation7 + $0x18] sm:$0xff]
    %v145 = vld [vmem:[#allocation7 + $0x20] sm:$0xff]
    %v146 = vld [vmem:[#allocation7 + $0x28] sm:$0xff]
    %v147 = vld [vmem:[#allocation7 + $0x30] sm:$0xff]
    %v148 = vld [vmem:[#allocation7 + $0x38] sm:$0xff]
    %v149 = vld [vmem:[#allocation7 + $0x40] sm:$0xff]
    %v150 = vld [vmem:[#allocation7 + $0x48] sm:$0xff]
    %v151 = vld [vmem:[#allocation7 + $0x50] sm:$0xff]
    %v152 = vld [vmem:[#allocation7 + $0x58] sm:$0xff]
    %v153 = vld [vmem:[#allocation7 + $0x60] sm:$0xff]
    %v154 = vld [vmem:[#allocation7 + $0x68] sm:$0xff]
    %v155 = vld [vmem:[#allocation7 + $0x70] sm:$0xff]
    %v156 = vld [vmem:[#allocation7 + $0x78] sm:$0xff]
    %v157 = vld [vmem:[%s4] sm:$0x1]
    %v159 = vperm.slane %v157, 0
    %161 = vmatpush.msra.mxu0 %v156
    %162 = vmatpush.msra.mxu0 %v155
    %163 = vmatpush.msra.mxu0 %v154
    %164 = vmatpush.msra.mxu0 %v153
    %165 = vmatpush.msra.mxu0 %v152
    %166 = vmatpush.msra.mxu0 %v151
    %167 = vmatpush.msra.mxu0 %v150
    %168 = vmatpush.msra.mxu0 %v149
    %169 = vmatpush.msra.mxu0 %v148
    %170 = vmatpush.msra.mxu0 %v147
    %171 = vmatpush.msra.mxu0 %v146
    %172 = vmatpush.msra.mxu0 %v145
    %173 = vmatpush.msra.mxu0 %v144
    %174 = vmatpush.msra.mxu0 %v143
    %175 = vmatpush.msra.mxu0 %v142
    %176 = vmatpush.msra.mxu0 %v141
    %177 = vmatmul.f32.gmra.mxu0 %v140
    %v178 = vpop.f32.mrf.mxu0
    %v179 = vadd.f32 %v159, %v178
    %180 = vdwg.mxu0
    %v181 = vmax.f32 %v179, 0.0
    %v182 = vld [vmem:[#allocation8] sm:$0xff]
    %v183 = vld [vmem:[#allocation8 + $0x8] sm:$0xff]
    %v184 = vld [vmem:[#allocation8 + $0x10] sm:$0xff]
    %v185 = vld [vmem:[#allocation8 + $0x18] sm:$0xff]
    %v186 = vld [vmem:[#allocation8 + $0x20] sm:$0xff]
    %v187 = vld [vmem:[#allocation8 + $0x28] sm:$0xff]
    %v188 = vld [vmem:[#allocation8 + $0x30] sm:$0xff]
    %v189 = vld [vmem:[#allocation8 + $0x38] sm:$0xff]
    %v190 = vld [vmem:[#allocation8 + $0x40] sm:$0xff]
    %v191 = vld [vmem:[#allocation8 + $0x48] sm:$0xff]
    %v192 = vld [vmem:[#allocation8 + $0x50] sm:$0xff]
    %v193 = vld [vmem:[#allocation8 + $0x58] sm:$0xff]
    %v194 = vld [vmem:[#allocation8 + $0x60] sm:$0xff]
    %v195 = vld [vmem:[#allocation8 + $0x68] sm:$0xff]
    %v196 = vld [vmem:[#allocation8 + $0x70] sm:$0xff]
    %v197 = vld [vmem:[#allocation8 + $0x78] sm:$0xff]
    %v198 = vld [vmem:[%s6] sm:$0x1]
    %v200 = vperm.slane %v198, 0
    %202 = vmatpush.msra.mxu0 %v197
    %203 = vmatpush.msra.mxu0 %v196
    %204 = vmatpush.msra.mxu0 %v195
    %205 = vmatpush.msra.mxu0 %v194
    %206 = vmatpush.msra.mxu0 %v193
    %207 = vmatpush.msra.mxu0 %v192
    %208 = vmatpush.msra.mxu0 %v191
    %209 = vmatpush.msra.mxu0 %v190
    %210 = vmatpush.msra.mxu0 %v189
    %211 = vmatpush.msra.mxu0 %v188
    %212 = vmatpush.msra.mxu0 %v187
    %213 = vmatpush.msra.mxu0 %v186
    %214 = vmatpush.msra.mxu0 %v185
    %215 = vmatpush.msra.mxu0 %v184
    %216 = vmatpush.msra.mxu0 %v183
    %217 = vmatpush.msra.mxu0 %v182
    %218 = vmatmul.f32.gmra.mxu0 %v181
    %v219 = vpop.f32.mrf.mxu0
    %v220 = vadd.f32 %v200, %v219
    %221 = vdwg.mxu0
    %v222 = vmax.f32 %v220, 0.0
    %v223 = vld [vmem:[#allocation10] sm:$0xff]
    %v224 = vld [vmem:[#allocation10 + $0x8] sm:$0xff]
    %v225 = vld [vmem:[#allocation10 + $0x10] sm:$0xff]
    %v226 = vld [vmem:[#allocation10 + $0x18] sm:$0xff]
    %v227 = vld [vmem:[#allocation10 + $0x20] sm:$0xff]
    %v228 = vld [vmem:[#allocation10 + $0x28] sm:$0xff]
    %v229 = vld [vmem:[#allocation10 + $0x30] sm:$0xff]
    %v230 = vld [vmem:[#allocation10 + $0x38] sm:$0xff]
    %v231 = vld [vmem:[#allocation10 + $0x40] sm:$0xff]
    %v232 = vld [vmem:[#allocation10 + $0x48] sm:$0xff]
    %v233 = vld [vmem:[#allocation10 + $0x50] sm:$0xff]
    %v234 = vld [vmem:[#allocation10 + $0x58] sm:$0xff]
    %v235 = vld [vmem:[#allocation10 + $0x60] sm:$0xff]
    %v236 = vld [vmem:[#allocation10 + $0x68] sm:$0xff]
    %v237 = vld [vmem:[#allocation10 + $0x70] sm:$0xff]
    %v238 = vld [vmem:[#allocation10 + $0x78] sm:$0xff]
    %v239 = vld [vmem:[%s8] sm:$0x1]
    %v241 = vperm.slane %v239, 0
    %243 = vmatpush.msra.mxu0 %v238
    %244 = vmatpush.msra.mxu0 %v237
    %245 = vmatpush.msra.mxu0 %v236
    %246 = vmatpush.msra.mxu0 %v235
    %247 = vmatpush.msra.mxu0 %v234
    %248 = vmatpush.msra.mxu0 %v233
    %249 = vmatpush.msra.mxu0 %v232
    %250 = vmatpush.msra.mxu0 %v231
    %251 = vmatpush.msra.mxu0 %v230
    %252 = vmatpush.msra.mxu0 %v229
    %253 = vmatpush.msra.mxu0 %v228
    %254 = vmatpush.msra.mxu0 %v227
    %255 = vmatpush.msra.mxu0 %v226
    %256 = vmatpush.msra.mxu0 %v225
    %257 = vmatpush.msra.mxu0 %v224
    %258 = vmatpush.msra.mxu0 %v223
    %259 = vmatmul.f32.gmra.mxu0 %v222
    %v260 = vpop.f32.mrf.mxu0
    %v261 = vadd.f32 %v241, %v260
    %262 = vdwg.mxu0
    %263 = vst [vmem:[#allocation11] sm:$0xff] %v261
    // Predicated region
    $region58: #{tpu_custom_call.1} parent=1 // pred_check
      _
    $region59: #{tpu_custom_call.1} parent=1 // pred_check_branch
      %265 = sbr.rel (0) target = $region61
    $region60: #{tpu_custom_call.1} parent=1 // pred_region
      %267 = vsyncadd [#allocation4], 0
      %s269 = sshll.u32 [#allocation11], 4
      %s270 = int_to_ptr.vmem [resolvable:$true] %s269
      %s271 = sshll.u32 %s9, 4
      %s272 = int_to_ptr.hbm [resolvable:$true] %s271
      %274 = dma.vmem_to_hbm [thread:$0]  %s270, 128, %s272, [#allocation4]
    $region61: #{tpu_custom_call.1} parent=1 // pred_fallthru
      _
    // Predicated region
    $region62: #{tpu_custom_call.1} parent=1 // pred_check
      _
    $region63: #{tpu_custom_call.1} parent=1 // pred_check_branch
      %276 = sbr.rel (0) target = $region65
    $region64: #{tpu_custom_call.1} parent=1 // pred_region
      %278 = dma.done [#allocation4], 128
    $region65: #{tpu_custom_call.1} parent=1 // pred_fallthru
      _
    %279 = vsyncpa [#allocation3], 1
    %280 = vsyncpa [#allocation6], 1
    %281 = vsyncpa [#allocation9], 1
    %282 = vsyncpa [#allocation4], 1

// kernel: tpu_custom_call.1
$region0: #{tpu_custom_call.1}
  #allocation0 [shape = 'u32[]', space=smem, size = 0x4, offset = 0x4, fixed_abs, tag = 'smem constant byte address 0x4 - core index']
  #allocation1 [shape = 'u32[72,128]{1,0:T(1,128)}', space=vmem, size = 0x9000, scoped, tag = 'internal scratch']
  %s0 = inlined_call_operand.hbm [shape: f32[8,16], index: 0, kind: input, shape index: {}]
  %s1 = inlined_call_operand.hbm [shape: f32[16,128], index: 1, kind: input, shape index: {}]
  %s2 = inlined_call_operand.vmem [shape: f32[1,128], index: 2, kind: input, shape index: {}]
  %s3 = inlined_call_operand.hbm [shape: f32[128,128], index: 3, kind: input, shape index: {}]
  %s4 = inlined_call_operand.vmem [shape: f32[1,128], index: 4, kind: input, shape index: {}]
  %s5 = inlined_call_operand.hbm [shape: f32[128,128], index: 5, kind: input, shape index: {}]
  %s6 = inlined_call_operand.vmem [shape: f32[1,128], index: 6, kind: input, shape index: {}]
  %s7 = inlined_call_operand.hbm [shape: f32[128,128], index: 7, kind: input, shape index: {}]
  %s8 = inlined_call_operand.vmem [shape: f32[1,128], index: 8, kind: input, shape index: {}]
  %s9 = inlined_call_operand.hbm [shape: f32[8,128], index: 9, kind: output, shape index: {}]
  %s10 = sld [smem:[#allocation0]]
  $region66: #{tpu_custom_call.1} parent=0
    _
  %s12 = ssub.s32 1, %s10
  %s13 = scalar_select 0, %s12, %s10
  $region1: #{tpu_custom_call.1} parent=0
    #allocation2 [shape = 'u8[4096]{0}', space=vmem, size = 0x1000, scoped, tag = 'input window, operand 0, single buffered']
    #allocation3 [shape = 's32[1]{0}', space=sflag, size = 0x4, scoped, tag = 'scoped memory for tpu_custom_call.1']
    #allocation4 [shape = 's32[1]{0}', space=sflag, size = 0x4, scoped, tag = 'scoped memory for tpu_custom_call.1']
    #allocation5 [shape = 'u8[8192]{0}', space=vmem, size = 0x2000, scoped, tag = 'input window, operand 1, single buffered']
    #allocation6 [shape = 's32[1]{0}', space=sflag, size = 0x4, scoped, tag = 'scoped memory for tpu_custom_call.1']
    #allocation7 [shape = 'u8[65536]{0}', space=vmem, size = 0x10000, scoped, tag = 'input window, operand 3, single buffered']
    #allocation8 [shape = 'u8[65536]{0}', space=vmem, size = 0x10000, scoped, tag = 'input window, operand 5, single buffered']
    #allocation9 [shape = 's32[1]{0}', space=sflag, size = 0x4, scoped, tag = 'scoped memory for tpu_custom_call.1']
    #allocation10 [shape = 'u8[65536]{0}', space=vmem, size = 0x10000, scoped, tag = 'input window, operand 7, single buffered']
    #allocation11 [shape = 'u8[4096]{0}', space=vmem, size = 0x1000, scoped, tag = 'output window, operand 0, single buffered']
    %14 = vsyncpa [#allocation3], 0
    %15 = vsyncpa [#allocation6], 0
    %16 = vsyncpa [#allocation9], 0
    %17 = vsyncpa [#allocation4], 0
    // Predicated region
    $region2: #{tpu_custom_call.1} parent=1 // pred_check
      _
    $region3: #{tpu_custom_call.1} parent=1 // pred_check_branch
      %19 = sbr.rel (0) target = $region5
    $region4: #{tpu_custom_call.1} parent=1 // pred_region
      %21 = vsyncadd [#allocation3], 0
      %s23 = sshll.u32 %s0, 4
      %s24 = int_to_ptr.hbm [resolvable:$true] %s23
      %s25 = sshll.u32 [#allocation2], 4
      %s26 = int_to_ptr.vmem [resolvable:$true] %s25
      %28 = dma.hbm_to_vmem [thread:$0]  %s24, 128, %s26, [#allocation3]
    $region5: #{tpu_custom_call.1} parent=1 // pred_fallthru
      _
    // Predicated region
    $region6: #{tpu_custom_call.1} parent=1 // pred_check
      _
    $region7: #{tpu_custom_call.1} parent=1 // pred_check_branch
      %30 = sbr.rel (0) target = $region9
    $region8: #{tpu_custom_call.1} parent=1 // pred_region
      %32 = vsyncadd [#allocation6], 0
      %s33 = sshll.u32 %s1, 4
      %s34 = int_to_ptr.hbm [resolvable:$true] %s33
      %s35 = sshll.u32 [#allocation5], 4
      %s36 = int_to_ptr.vmem [resolvable:$true] %s35
      %41 = dma.hbm_to_vmem [thread:$0]  %s34, 256, %s36, [#allocation6], 128, 128, 8
    $region9: #{tpu_custom_call.1} parent=1 // pred_fallthru
      _
    // Predicated region
    $region10: #{tpu_custom_call.1} parent=1 // pred_check
      _
    $region11: #{tpu_custom_call.1} parent=1 // pred_check_branch
      %43 = sbr.rel (0) target = $region13
    $region12: #{tpu_custom_call.1} parent=1 // pred_region
      _
    $region13: #{tpu_custom_call.1} parent=1 // pred_fallthru
      _
    // Predicated region
    $region14: #{tpu_custom_call.1} parent=1 // pred_check
      _
    $region15: #{tpu_custom_call.1} parent=1 // pred_check_branch
      %45 = sbr.rel (0) target = $region17
    $region16: #{tpu_custom_call.1} parent=1 // pred_region
      %47 = vsyncadd [#allocation6], 0
      %s48 = sshll.u32 %s3, 4
      %s49 = int_to_ptr.hbm [resolvable:$true] %s48
      %s50 = sshll.u32 [#allocation7], 4
      %s51 = int_to_ptr.vmem [resolvable:$true] %s50
      %56 = dma.hbm_to_vmem [thread:$0]  %s49, 2048, %s51, [#allocation6], 128, 128, 8
    $region17: #{tpu_custom_call.1} parent=1 // pred_fallthru
      _
    // Predicated region
    $region18: #{tpu_custom_call.1} parent=1 // pred_check
      _
    $region19: #{tpu_custom_call.1} parent=1 // pred_check_branch
      %58 = sbr.rel (0) target = $region21
    $region20: #{tpu_custom_call.1} parent=1 // pred_region
      _
    $region21: #{tpu_custom_call.1} parent=1 // pred_fallthru
      _
    // Predicated region
    $region22: #{tpu_custom_call.1} parent=1 // pred_check
      _
    $region23: #{tpu_custom_call.1} parent=1 // pred_check_branch
      %60 = sbr.rel (0) target = $region25
    $region24: #{tpu_custom_call.1} parent=1 // pred_region
      %62 = vsyncadd [#allocation9], 0
      %s63 = sshll.u32 %s5, 4
      %s64 = int_to_ptr.hbm [resolvable:$true] %s63
      %s65 = sshll.u32 [#allocation8], 4
      %s66 = int_to_ptr.vmem [resolvable:$true] %s65
      %71 = dma.hbm_to_vmem [thread:$0]  %s64, 2048, %s66, [#allocation9], 128, 128, 8
    $region25: #{tpu_custom_call.1} parent=1 // pred_fallthru
      _
    // Predicated region
    $region26: #{tpu_custom_call.1} parent=1 // pred_check
      _
    $region27: #{tpu_custom_call.1} parent=1 // pred_check_branch
      %73 = sbr.rel (0) target = $region29
    $region28: #{tpu_custom_call.1} parent=1 // pred_region
      _
    $region29: #{tpu_custom_call.1} parent=1 // pred_fallthru
      _
    // Predicated region
    $region30: #{tpu_custom_call.1} parent=1 // pred_check
      _
    $region31: #{tpu_custom_call.1} parent=1 // pred_check_branch
      %75 = sbr.rel (0) target = $region33
    $region32: #{tpu_custom_call.1} parent=1 // pred_region
      %77 = vsyncadd [#allocation9], 0
      %s78 = sshll.u32 %s7, 4
      %s79 = int_to_ptr.hbm [resolvable:$true] %s78
      %s80 = sshll.u32 [#allocation10], 4
      %s81 = int_to_ptr.vmem [resolvable:$true] %s80
      %86 = dma.hbm_to_vmem [thread:$0]  %s79, 2048, %s81, [#allocation9], 128, 128, 8
    $region33: #{tpu_custom_call.1} parent=1 // pred_fallthru
      _
    // Predicated region
    $region34: #{tpu_custom_call.1} parent=1 // pred_check
      _
    $region35: #{tpu_custom_call.1} parent=1 // pred_check_branch
      %88 = sbr.rel (0) target = $region37
    $region36: #{tpu_custom_call.1} parent=1 // pred_region
      _
    $region37: #{tpu_custom_call.1} parent=1 // pred_fallthru
      _
    // Predicated region
    $region38: #{tpu_custom_call.1} parent=1 // pred_check
      _
    $region39: #{tpu_custom_call.1} parent=1 // pred_check_branch
      %90 = sbr.rel (0) target = $region41
    $region40: #{tpu_custom_call.1} parent=1 // pred_region
      %92 = dma.done [#allocation3], 128
    $region41: #{tpu_custom_call.1} parent=1 // pred_fallthru
      _
    // Predicated region
    $region42: #{tpu_custom_call.1} parent=1 // pred_check
      _
    $region43: #{tpu_custom_call.1} parent=1 // pred_check_branch
      %94 = sbr.rel (0) target = $region45
    $region44: #{tpu_custom_call.1} parent=1 // pred_region
      %96 = dma.done [#allocation6], 256
    $region45: #{tpu_custom_call.1} parent=1 // pred_fallthru
      _
    // Predicated region
    $region46: #{tpu_custom_call.1} parent=1 // pred_check
      _
    $region47: #{tpu_custom_call.1} parent=1 // pred_check_branch
      %98 = sbr.rel (0) target = $region49
    $region48: #{tpu_custom_call.1} parent=1 // pred_region
      %100 = dma.done [#allocation6], 2048
    $region49: #{tpu_custom_call.1} parent=1 // pred_fallthru
      _
    // Predicated region
    $region50: #{tpu_custom_call.1} parent=1 // pred_check
      _
    $region51: #{tpu_custom_call.1} parent=1 // pred_check_branch
      %102 = sbr.rel (0) target = $region53
    $region52: #{tpu_custom_call.1} parent=1 // pred_region
      %104 = dma.done [#allocation9], 2048
    $region53: #{tpu_custom_call.1} parent=1 // pred_fallthru
      _
    // Predicated region
    $region54: #{tpu_custom_call.1} parent=1 // pred_check
      _
    $region55: #{tpu_custom_call.1} parent=1 // pred_check_branch
      %106 = sbr.rel (0) target = $region57
    $region56: #{tpu_custom_call.1} parent=1 // pred_region
      %108 = dma.done [#allocation9], 2048
    $region57: #{tpu_custom_call.1} parent=1 // pred_fallthru
      _
    %v109 = vld [vmem:[#allocation2] sm:$0xff]
    %v110 = vld [vmem:[#allocation5] sm:$0xff]
    %v111 = vld [vmem:[#allocation5 + $0x8] sm:$0xff]
    %v112 = vld [vmem:[%s2] sm:$0x1]
    %v114 = vperm.slane %v112, 0
    %vm116 = vcmask 130048
    %v118 = vsel %vm116, %v109, 0
    %120 = vmatpush.msra.mxu0 0.0
    %121 = vmatpush.msra.mxu0 0.0
    %122 = vmatpush.msra.mxu0 0.0
    %123 = vmatpush.msra.mxu0 0.0
    %124 = vmatpush.msra.mxu0 0.0
    %125 = vmatpush.msra.mxu0 0.0
    %126 = vmatpush.msra.mxu0 0.0
    %127 = vmatpush.msra.mxu0 0.0
    %128 = vmatpush.msra.mxu0 0.0
    %129 = vmatpush.msra.mxu0 0.0
    %130 = vmatpush.msra.mxu0 0.0
    %131 = vmatpush.msra.mxu0 0.0
    %132 = vmatpush.msra.mxu0 0.0
    %133 = vmatpush.msra.mxu0 0.0
    %134 = vmatpush.msra.mxu0 %v111
    %135 = vmatpush.msra.mxu0 %v110
    %136 = vmatmul.f32.gmra.mxu0 %v118
    %v137 = vpop.f32.mrf.mxu0
    %v138 = vadd.f32 %v114, %v137
    %139 = vdwg.mxu0
    %v140 = vmax.f32 %v138, 0.0
    %v141 = vld [vmem:[#allocation7] sm:$0xff]
    %v142 = vld [vmem:[#allocation7 + $0x8] sm:$0xff]
    %v143 = vld [vmem:[#allocation7 + $0x10] sm:$0xff]
    %v144 = vld [vmem:[#allocation7 + $0x18] sm:$0xff]
    %v145 = vld [vmem:[#allocation7 + $0x20] sm:$0xff]
    %v146 = vld [vmem:[#allocation7 + $0x28] sm:$0xff]
    %v147 = vld [vmem:[#allocation7 + $0x30] sm:$0xff]
    %v148 = vld [vmem:[#allocation7 + $0x38] sm:$0xff]
    %v149 = vld [vmem:[#allocation7 + $0x40] sm:$0xff]
    %v150 = vld [vmem:[#allocation7 + $0x48] sm:$0xff]
    %v151 = vld [vmem:[#allocation7 + $0x50] sm:$0xff]
    %v152 = vld [vmem:[#allocation7 + $0x58] sm:$0xff]
    %v153 = vld [vmem:[#allocation7 + $0x60] sm:$0xff]
    %v154 = vld [vmem:[#allocation7 + $0x68] sm:$0xff]
    %v155 = vld [vmem:[#allocation7 + $0x70] sm:$0xff]
    %v156 = vld [vmem:[#allocation7 + $0x78] sm:$0xff]
    %v157 = vld [vmem:[%s4] sm:$0x1]
    %v159 = vperm.slane %v157, 0
    %161 = vmatpush.msra.mxu0 %v156
    %162 = vmatpush.msra.mxu0 %v155
    %163 = vmatpush.msra.mxu0 %v154
    %164 = vmatpush.msra.mxu0 %v153
    %165 = vmatpush.msra.mxu0 %v152
    %166 = vmatpush.msra.mxu0 %v151
    %167 = vmatpush.msra.mxu0 %v150
    %168 = vmatpush.msra.mxu0 %v149
    %169 = vmatpush.msra.mxu0 %v148
    %170 = vmatpush.msra.mxu0 %v147
    %171 = vmatpush.msra.mxu0 %v146
    %172 = vmatpush.msra.mxu0 %v145
    %173 = vmatpush.msra.mxu0 %v144
    %174 = vmatpush.msra.mxu0 %v143
    %175 = vmatpush.msra.mxu0 %v142
    %176 = vmatpush.msra.mxu0 %v141
    %177 = vmatmul.f32.gmra.mxu0 %v140
    %v178 = vpop.f32.mrf.mxu0
    %v179 = vadd.f32 %v159, %v178
    %180 = vdwg.mxu0
    %v181 = vmax.f32 %v179, 0.0
    %v182 = vld [vmem:[#allocation8] sm:$0xff]
    %v183 = vld [vmem:[#allocation8 + $0x8] sm:$0xff]
    %v184 = vld [vmem:[#allocation8 + $0x10] sm:$0xff]
    %v185 = vld [vmem:[#allocation8 + $0x18] sm:$0xff]
    %v186 = vld [vmem:[#allocation8 + $0x20] sm:$0xff]
    %v187 = vld [vmem:[#allocation8 + $0x28] sm:$0xff]
    %v188 = vld [vmem:[#allocation8 + $0x30] sm:$0xff]
    %v189 = vld [vmem:[#allocation8 + $0x38] sm:$0xff]
    %v190 = vld [vmem:[#allocation8 + $0x40] sm:$0xff]
    %v191 = vld [vmem:[#allocation8 + $0x48] sm:$0xff]
    %v192 = vld [vmem:[#allocation8 + $0x50] sm:$0xff]
    %v193 = vld [vmem:[#allocation8 + $0x58] sm:$0xff]
    %v194 = vld [vmem:[#allocation8 + $0x60] sm:$0xff]
    %v195 = vld [vmem:[#allocation8 + $0x68] sm:$0xff]
    %v196 = vld [vmem:[#allocation8 + $0x70] sm:$0xff]
    %v197 = vld [vmem:[#allocation8 + $0x78] sm:$0xff]
    %v198 = vld [vmem:[%s6] sm:$0x1]
    %v200 = vperm.slane %v198, 0
    %202 = vmatpush.msra.mxu0 %v197
    %203 = vmatpush.msra.mxu0 %v196
    %204 = vmatpush.msra.mxu0 %v195
    %205 = vmatpush.msra.mxu0 %v194
    %206 = vmatpush.msra.mxu0 %v193
    %207 = vmatpush.msra.mxu0 %v192
    %208 = vmatpush.msra.mxu0 %v191
    %209 = vmatpush.msra.mxu0 %v190
    %210 = vmatpush.msra.mxu0 %v189
    %211 = vmatpush.msra.mxu0 %v188
    %212 = vmatpush.msra.mxu0 %v187
    %213 = vmatpush.msra.mxu0 %v186
    %214 = vmatpush.msra.mxu0 %v185
    %215 = vmatpush.msra.mxu0 %v184
    %216 = vmatpush.msra.mxu0 %v183
    %217 = vmatpush.msra.mxu0 %v182
    %218 = vmatmul.f32.gmra.mxu0 %v181
    %v219 = vpop.f32.mrf.mxu0
    %v220 = vadd.f32 %v200, %v219
    %221 = vdwg.mxu0
    %v222 = vmax.f32 %v220, 0.0
    %v223 = vld [vmem:[#allocation10] sm:$0xff]
    %v224 = vld [vmem:[#allocation10 + $0x8] sm:$0xff]
    %v225 = vld [vmem:[#allocation10 + $0x10] sm:$0xff]
    %v226 = vld [vmem:[#allocation10 + $0x18] sm:$0xff]
    %v227 = vld [vmem:[#allocation10 + $0x20] sm:$0xff]
    %v228 = vld [vmem:[#allocation10 + $0x28] sm:$0xff]
    %v229 = vld [vmem:[#allocation10 + $0x30] sm:$0xff]
    %v230 = vld [vmem:[#allocation10 + $0x38] sm:$0xff]
    %v231 = vld [vmem:[#allocation10 + $0x40] sm:$0xff]
    %v232 = vld [vmem:[#allocation10 + $0x48] sm:$0xff]
    %v233 = vld [vmem:[#allocation10 + $0x50] sm:$0xff]
    %v234 = vld [vmem:[#allocation10 + $0x58] sm:$0xff]
    %v235 = vld [vmem:[#allocation10 + $0x60] sm:$0xff]
    %v236 = vld [vmem:[#allocation10 + $0x68] sm:$0xff]
    %v237 = vld [vmem:[#allocation10 + $0x70] sm:$0xff]
    %v238 = vld [vmem:[#allocation10 + $0x78] sm:$0xff]
    %v239 = vld [vmem:[%s8] sm:$0x1]
    %v241 = vperm.slane %v239, 0
    %243 = vmatpush.msra.mxu0 %v238
    %244 = vmatpush.msra.mxu0 %v237
    %245 = vmatpush.msra.mxu0 %v236
    %246 = vmatpush.msra.mxu0 %v235
    %247 = vmatpush.msra.mxu0 %v234
    %248 = vmatpush.msra.mxu0 %v233
    %249 = vmatpush.msra.mxu0 %v232
    %250 = vmatpush.msra.mxu0 %v231
    %251 = vmatpush.msra.mxu0 %v230
    %252 = vmatpush.msra.mxu0 %v229
    %253 = vmatpush.msra.mxu0 %v228
    %254 = vmatpush.msra.mxu0 %v227
    %255 = vmatpush.msra.mxu0 %v226
    %256 = vmatpush.msra.mxu0 %v225
    %257 = vmatpush.msra.mxu0 %v224
    %258 = vmatpush.msra.mxu0 %v223
    %259 = vmatmul.f32.gmra.mxu0 %v222
    %v260 = vpop.f32.mrf.mxu0
    %v261 = vadd.f32 %v241, %v260
    %262 = vdwg.mxu0
    %263 = vst [vmem:[#allocation11] sm:$0xff] %v261
    // Predicated region
    $region58: #{tpu_custom_call.1} parent=1 // pred_check
      _
    $region59: #{tpu_custom_call.1} parent=1 // pred_check_branch
      %265 = sbr.rel (0) target = $region61
    $region60: #{tpu_custom_call.1} parent=1 // pred_region
      %267 = vsyncadd [#allocation4], 0
      %s269 = sshll.u32 [#allocation11], 4
      %s270 = int_to_ptr.vmem [resolvable:$true] %s269
      %s271 = sshll.u32 %s9, 4
      %s272 = int_to_ptr.hbm [resolvable:$true] %s271
      %274 = dma.vmem_to_hbm [thread:$0]  %s270, 128, %s272, [#allocation4]
    $region61: #{tpu_custom_call.1} parent=1 // pred_fallthru
      _
    // Predicated region
    $region62: #{tpu_custom_call.1} parent=1 // pred_check
      _
    $region63: #{tpu_custom_call.1} parent=1 // pred_check_branch
      %276 = sbr.rel (0) target = $region65
    $region64: #{tpu_custom_call.1} parent=1 // pred_region
      %278 = dma.done [#allocation4], 128
    $region65: #{tpu_custom_call.1} parent=1 // pred_fallthru
      _
    %279 = vsyncpa [#allocation3], 1
    %280 = vsyncpa [#allocation6], 1
    %281 = vsyncpa [#allocation9], 1
    %282 = vsyncpa [#allocation4], 1

</llo_original>
